<compile_context>
chip_gen: v5e
topology: v5e:2x2
jax: 0.10.0
libtpu: 0.0.40
codegen_flags: <defaults>
</compile_context>

<pallas_src>
import jax
import jax.numpy as jnp
from jax.experimental import pallas as pl
from jax.experimental.pallas import tpu as pltpu


def conv1x1_tanh_kernel(x_ref, w_ref, b_ref, o_ref):
    # x_ref: (Cin, tm)   pixels on lanes, channels on sublanes
    # w_ref: (Cout, Cin) tiny weight tile
    # b_ref: (Cout, 1)
    # o_ref: (Cout, tm)  lane-dense output
    w = w_ref[...]
    cin = x_ref.shape[0]
    # VPU path: acc[co, p] = b[co] + sum_ci w[co, ci] * x[ci, p]
    acc = w[:, 0:1] * x_ref[0:1, :] + b_ref[...]   # bias folded into term 0
    for ci in range(1, cin):
        acc = acc + w[:, ci : ci + 1] * x_ref[ci : ci + 1, :]
    o_ref[...] = jnp.tanh(acc).astype(o_ref.dtype)


def _pick_tile(hw, n, lane=128, cap=64 * 1024):
    """Pixel-tile size: big enough to amortize the ~0.35us per-step overhead,
    small enough for default scoped VMEM (128*tm bytes of pipeline buffers),
    and (when cheap) >=2 grid steps so both v7x TensorCores get work."""
    if hw > cap:
        return cap                       # 128-multiple; ragged last block OK
    if n >= 2 or hw < 2 * lane:
        return hw                        # one full-dim block per image
    # n == 1, mid-size image: split roughly in half on a lane boundary.
    return max(lane, pl.cdiv(pl.cdiv(hw, 2), lane) * lane)


def conv1x1_tanh(x_nchw, weight, bias, padding=1):
    N, Cin, H, W = x_nchw.shape
    Cout = weight.shape[0]
    assert weight.shape == (Cout, Cin, 1, 1)

    # Zero-pad the 3-channel input spatially; the 1x1 conv over the zero
    # border then yields tanh(bias) there (PyTorch zero-padding semantics),
    # so no output post-processing is needed.
    Hp, Wp = H + 2 * padding, W + 2 * padding
    xp = jnp.pad(
        x_nchw.astype(jnp.float32),
        ((0, 0), (0, 0), (padding, padding), (padding, padding)),
    )

    HW = Hp * Wp
    tm = _pick_tile(HW, N)
    n_j = pl.cdiv(HW, tm)

    # NCHW view with pixels flattened on the last (lane) axis. No transpose.
    x3d = xp.reshape(N, Cin, HW)
    w2d = weight.reshape(Cout, Cin).astype(jnp.float32)   # (Cout, Cin)
    b2d = bias.reshape(Cout, 1).astype(jnp.float32)       # (Cout, 1)

    out3d = pl.pallas_call(
        conv1x1_tanh_kernel,
        out_shape=jax.ShapeDtypeStruct((N, Cout, HW), jnp.float32),
        grid=(N, n_j),
        in_specs=[
            pl.BlockSpec((None, Cin, tm), lambda n, j: (n, 0, j)),
            pl.BlockSpec((Cout, Cin), lambda n, j: (0, 0)),
            pl.BlockSpec((Cout, 1), lambda n, j: (0, 0)),
        ],
        out_specs=pl.BlockSpec((None, Cout, tm), lambda n, j: (n, 0, j)),
        compiler_params=pltpu.CompilerParams(
            dimension_semantics=("parallel", "parallel")
        ),
    )(x3d, w2d, b2d)

    # HW == Hp*Wp exactly (no lane padding was added), so this is a pure view.
    return out3d.reshape(N, Cout, Hp, Wp)


if __name__ == "__main__":
    key = jax.random.PRNGKey(0)
    kx, kw, kb = jax.random.split(key, 3)

    # Small shapes consistent with the module: Conv2d(3, 8, 1, padding=1).
    N, Cin, H, W, Cout = 2, 3, 16, 16, 8
    x = jax.random.normal(kx, (N, Cin, H, W), dtype=jnp.float32)

    # Deterministic parameter init (PyTorch-like uniform fan-in scaling).
    fan_in = Cin * 1 * 1
    bound = 1.0 / (fan_in ** 0.5)
    weight = jax.random.uniform(
        kw, (Cout, Cin, 1, 1), minval=-bound, maxval=bound, dtype=jnp.float32
    )
    bias = jax.random.uniform(
        kb, (Cout,), minval=-bound, maxval=bound, dtype=jnp.float32
    )

    out = conv1x1_tanh(x, weight, bias, padding=1)
    out = jax.block_until_ready(out)

    # Cross-check against a pure-JAX reference of the same semantics.
    x_pad = jnp.pad(
        jnp.transpose(x, (0, 2, 3, 1)), ((0, 0), (1, 1), (1, 1), (0, 0))
    )
    ref = jnp.tanh(
        jnp.einsum("nhwc,oc->nhwo", x_pad, weight.reshape(Cout, Cin)) + bias
    )
    ref = jnp.transpose(ref, (0, 3, 1, 2))
    assert out.shape == (N, Cout, H + 2, W + 2), out.shape
    assert jnp.allclose(out, ref, atol=1e-5, rtol=1e-5)

    print("KERNEL_OK")
</pallas_src>

<mosaic_0001>
module attributes {stable_mosaic.version = 11 : i64} {
  func.func @conv1x1_tanh_kernel(%arg0: i32, %arg1: i32, %arg2: memref<1x3x324xf32, #tpu.memory_space<vmem>>, %arg3: memref<8x3xf32, #tpu.memory_space<vmem>>, %arg4: memref<8x1xf32, #tpu.memory_space<vmem>>, %arg5: memref<1x8x324xf32, #tpu.memory_space<vmem>>) attributes {dimension_semantics = [#tpu.dimension_semantics<parallel>, #tpu.dimension_semantics<parallel>], iteration_bounds = array<i64: 2, 1>, scalar_prefetch = 0 : i64, scratch_operands = 0 : i64, tpu.core_type = #tpu.core_type<tc>, window_params = [{transform_indices = @transform_0, window_bounds = array<i64: 1, 3, 324>}, {pipeline_mode = #tpu.pipeline_mode<synchronous>, transform_indices = @transform_1, window_bounds = array<i64: 8, 3>}, {pipeline_mode = #tpu.pipeline_mode<synchronous>, transform_indices = @transform_2, window_bounds = array<i64: 8, 1>}, {transform_indices = @transform_3, window_bounds = array<i64: 1, 8, 324>}]} {
    %c0 = arith.constant 0 : index
    %c0_0 = arith.constant 0 : index
    %0 = vector.load %arg3[%c0, %c0_0] : memref<8x3xf32, #tpu.memory_space<vmem>>, vector<8x3xf32>
    %1 = vector.extract_strided_slice %0 {offsets = [0, 0], sizes = [8, 1], strides = [1, 1]} : vector<8x3xf32> to vector<8x1xf32>
    %c0_1 = arith.constant 0 : index
    %c0_2 = arith.constant 0 : index
    %c0_3 = arith.constant 0 : index
    %2 = vector.load %arg2[%c0_1, %c0_2, %c0_3] : memref<1x3x324xf32, #tpu.memory_space<vmem>>, vector<1x1x324xf32>
    %3 = vector.shape_cast %2 : vector<1x1x324xf32> to vector<1x324xf32>
    %4 = vector.broadcast %1 : vector<8x1xf32> to vector<8x324xf32>
    %5 = vector.broadcast %3 : vector<1x324xf32> to vector<8x324xf32>
    %6 = arith.mulf %4, %5 : vector<8x324xf32>
    %c0_4 = arith.constant 0 : index
    %c0_5 = arith.constant 0 : index
    %7 = vector.load %arg4[%c0_4, %c0_5] : memref<8x1xf32, #tpu.memory_space<vmem>>, vector<8x1xf32>
    %8 = vector.broadcast %7 : vector<8x1xf32> to vector<8x324xf32>
    %9 = arith.addf %6, %8 : vector<8x324xf32>
    %10 = vector.extract_strided_slice %0 {offsets = [0, 1], sizes = [8, 1], strides = [1, 1]} : vector<8x3xf32> to vector<8x1xf32>
    %c0_6 = arith.constant 0 : index
    %c1 = arith.constant 1 : index
    %c0_7 = arith.constant 0 : index
    %11 = vector.load %arg2[%c0_6, %c1, %c0_7] : memref<1x3x324xf32, #tpu.memory_space<vmem>>, vector<1x1x324xf32>
    %12 = vector.shape_cast %11 : vector<1x1x324xf32> to vector<1x324xf32>
    %13 = vector.broadcast %10 : vector<8x1xf32> to vector<8x324xf32>
    %14 = vector.broadcast %12 : vector<1x324xf32> to vector<8x324xf32>
    %15 = arith.mulf %13, %14 : vector<8x324xf32>
    %16 = arith.addf %9, %15 : vector<8x324xf32>
    %17 = vector.extract_strided_slice %0 {offsets = [0, 2], sizes = [8, 1], strides = [1, 1]} : vector<8x3xf32> to vector<8x1xf32>
    %c0_8 = arith.constant 0 : index
    %c2 = arith.constant 2 : index
    %c0_9 = arith.constant 0 : index
    %18 = vector.load %arg2[%c0_8, %c2, %c0_9] : memref<1x3x324xf32, #tpu.memory_space<vmem>>, vector<1x1x324xf32>
    %19 = vector.shape_cast %18 : vector<1x1x324xf32> to vector<1x324xf32>
    %20 = vector.broadcast %17 : vector<8x1xf32> to vector<8x324xf32>
    %21 = vector.broadcast %19 : vector<1x324xf32> to vector<8x324xf32>
    %22 = arith.mulf %20, %21 : vector<8x324xf32>
    %23 = arith.addf %16, %22 : vector<8x324xf32>
    %24 = math.tanh %23 : vector<8x324xf32>
    %c0_10 = arith.constant 0 : index
    %c0_11 = arith.constant 0 : index
    %c0_12 = arith.constant 0 : index
    %25 = vector.load %arg5[%c0_10, %c0_11, %c0_12] : memref<1x8x324xf32, #tpu.memory_space<vmem>>, vector<1x8x324xf32>
    %26 = vector.shape_cast %25 : vector<1x8x324xf32> to vector<8x324xf32>
    %27 = vector.shape_cast %24 : vector<8x324xf32> to vector<1x8x324xf32>
    tpu.vector_store %arg5[%c0_10, %c0_11, %c0_12], %27 {strides = array<i32>} : memref<1x8x324xf32, #tpu.memory_space<vmem>>, vector<1x8x324xf32>,
    return
  }
  func.func @transform_0(%arg0: i32, %arg1: i32) -> (i32, i32, i32) {
    %c0_i32 = arith.constant 0 : i32
    %c0_i32_0 = arith.constant 0 : i32
    return %arg0, %c0_i32, %arg1 : i32, i32, i32
  }
  func.func @transform_1(%arg0: i32, %arg1: i32) -> (i32, i32) {
    %c0_i32 = arith.constant 0 : i32
    %c0_i32_0 = arith.constant 0 : i32
    %c0_i32_1 = arith.constant 0 : i32
    return %c0_i32, %c0_i32_0 : i32, i32
  }
  func.func @transform_2(%arg0: i32, %arg1: i32) -> (i32, i32) {
    %c0_i32 = arith.constant 0 : i32
    %c0_i32_0 = arith.constant 0 : i32
    %c0_i32_1 = arith.constant 0 : i32
    return %c0_i32, %c0_i32_0 : i32, i32
  }
  func.func @transform_3(%arg0: i32, %arg1: i32) -> (i32, i32, i32) {
    %c0_i32 = arith.constant 0 : i32
    %c0_i32_0 = arith.constant 0 : i32
    return %arg0, %c0_i32, %arg1 : i32, i32, i32
  }
}

</mosaic_0001>

<llo_original>
// kernel: tpu_custom_call.1
$region0: #{tpu_custom_call.1}
  #allocation0 [shape = 'u32[]', space=smem, size = 0x4, offset = 0x4, fixed_abs, tag = 'smem constant byte address 0x4 - core index']
  #allocation1 [shape = 'u32[72,128]{1,0:T(1,128)}', space=vmem, size = 0x9000, scoped, tag = 'internal scratch']
  %s0 = inlined_call_operand.vmem [shape: f32[2,3,324], index: 0, kind: input, shape index: {}]
  %s1 = inlined_call_operand.vmem [shape: f32[8,3], index: 1, kind: input, shape index: {}]
  %s2 = inlined_call_operand.vmem [shape: f32[8,1], index: 2, kind: input, shape index: {}]
  %s3 = inlined_call_operand.hbm [shape: f32[2,8,324], index: 3, kind: output, shape index: {}]
  %s4 = sld [smem:[#allocation0]]
  $region45: #{tpu_custom_call.1} parent=0
    _
  %s6 = ssub.s32 1, %s4
  %s7 = scalar_select 0, %s6, %s4
  $region1: #{tpu_custom_call.1} parent=0
    #allocation2 [shape = 'u8[24576]{0}', space=vmem, size = 0x6000, scoped, tag = 'output window, operand 0']
    #allocation3 [shape = 's32[2]{0}', space=sflag, size = 0x8, scoped, tag = 'scoped memory for tpu_custom_call.1']
    %8 = vsyncpa [#allocation3], 0
    %s9 = scalar_lea.sflag [#allocation3], 1
    %10 = vsyncpa %s9, 0
    loop: start=0, step=1, limit=4
    $region2: #{tpu_custom_call.1} parent=1 // loop_pre_header
      _
    $region3: #{tpu_custom_call.1} parent=1 // loop_header
      %s12 = sphi 0, %s16
      %p13 = scmp.ge.s32.totalorder %s12, 4
      %s19 = sphi 0, %s31
      %s20 = sphi 0, %s27
      %s21 = sphi 0, %s19
      %s22 = sphi 0, %s20
      %s23 = sphi 0, %s21
      %s24 = sphi 0, %s22
      %s36 = sphi 0, %s38
      %s39 = sphi 0, %s36
      %s40 = sphi 0, %s39
      %s56 = sphi 0, %s40
      %s60 = sphi 0, %s60
      %s62 = sphi 0, %s60
      %s63 = sphi 0, %s62
      %s77 = sphi 0, %s63
      %s81 = sphi 0, %s81
      %s83 = sphi 0, %s81
      %s84 = sphi 0, %s83
      %s98 = sphi 0, %s84
      %s106 = sphi 0, %s108
      %s109 = sphi 0, %s106
      %s110 = sphi 0, %s109
      %s126 = sphi 0, %s110
    $region4: #{tpu_custom_call.1} parent=1 // loop_header_branch
      %15 = sbr.rel (%p13) target = $region8
    $region5: #{tpu_custom_call.1} parent=1 // loop_body
      %s17 = ssub.s32 %s12, 1
      %s18 = ssub.s32 %s12, 2
      %s25 = sadd.s32 1, %s20
      %p26 = scmp.ge.s32.totalorder %s25, 1
      %s27 = scalar_select %p26, 0, %s25
      %s28 = sadd.s32 1, %s19
      %s29 = scalar_select %p26, %s28, %s19
      %p30 = scmp.ge.s32.totalorder %s29, 2
      %s31 = scalar_select %p30, 0, %s29
      %s32 = ssub.s32 %s19, %s31
      %s33 = ssub.s32 %s20, %s27
      %s34 = sor.u32 %s32, %s33
      %p35 = scmp.eq.s32.totalorder %s34, 0
      %s37 = sadd.s32 %s36, 1
      %s38 = scalar_select %p35, %s36, %s37
      %p41 = pneg %p35
      %p42 = scmp.eq.s32.totalorder %s12, 1
      %p43 = por %p41, %p42
      %p44 = scmp.ne.s32.totalorder %s36, %s39
      %p45 = scmp.eq.s32.totalorder %s12, 0
      %p46 = por %p44, %p45
      %p47 = scmp.ne.s32.totalorder %s36, %s39
      %p48 = scmp.eq.s32.totalorder %s17, 1
      %p49 = por %p47, %p48
      %p50 = scmp.ne.s32.totalorder %s39, %s40
      %p51 = scmp.eq.s32.totalorder %s17, 0
      %p52 = por %p50, %p51
      %p53 = scmp.ne.s32.totalorder %s39, %s40
      %p54 = scmp.eq.s32.totalorder %s18, 1
      %p55 = por %p53, %p54
      %p57 = scmp.ne.s32.totalorder %s40, %s56
      %p58 = scmp.eq.s32.totalorder %s18, 0
      %p59 = por %p57, %p58
      %s61 = sadd.s32 %s60, 1
      %p64 = scmp.eq.s32.totalorder %s12, 1
      %p65 = scmp.ne.s32.totalorder %s60, %s62
      %p66 = scmp.eq.s32.totalorder %s12, 0
      %p67 = por %p65, %p66
      %p68 = scmp.ne.s32.totalorder %s60, %s62
      %p69 = scmp.eq.s32.totalorder %s17, 1
      %p70 = por %p68, %p69
      %p71 = scmp.ne.s32.totalorder %s62, %s63
      %p72 = scmp.eq.s32.totalorder %s17, 0
      %p73 = por %p71, %p72
      %p74 = scmp.ne.s32.totalorder %s62, %s63
      %p75 = scmp.eq.s32.totalorder %s18, 1
      %p76 = por %p74, %p75
      %p78 = scmp.ne.s32.totalorder %s63, %s77
      %p79 = scmp.eq.s32.totalorder %s18, 0
      %p80 = por %p78, %p79
      %s82 = sadd.s32 %s81, 1
      %p85 = scmp.eq.s32.totalorder %s12, 1
      %p86 = scmp.ne.s32.totalorder %s81, %s83
      %p87 = scmp.eq.s32.totalorder %s12, 0
      %p88 = por %p86, %p87
      %p89 = scmp.ne.s32.totalorder %s81, %s83
      %p90 = scmp.eq.s32.totalorder %s17, 1
      %p91 = por %p89, %p90
      %p92 = scmp.ne.s32.totalorder %s83, %s84
      %p93 = scmp.eq.s32.totalorder %s17, 0
      %p94 = por %p92, %p93
      %p95 = scmp.ne.s32.totalorder %s83, %s84
      %p96 = scmp.eq.s32.totalorder %s18, 1
      %p97 = por %p95, %p96
      %p99 = scmp.ne.s32.totalorder %s84, %s98
      %p100 = scmp.eq.s32.totalorder %s18, 0
      %p101 = por %p99, %p100
      %s102 = ssub.s32 %s19, %s31
      %s103 = ssub.s32 %s20, %s27
      %s104 = sor.u32 %s102, %s103
      %p105 = scmp.eq.s32.totalorder %s104, 0
      %s107 = sadd.s32 %s106, 1
      %s108 = scalar_select %p105, %s106, %s107
      %p111 = pneg %p105
      %p112 = scmp.eq.s32.totalorder %s12, 1
      %p113 = por %p111, %p112
      %p114 = scmp.ne.s32.totalorder %s106, %s109
      %p115 = scmp.eq.s32.totalorder %s12, 0
      %p116 = por %p114, %p115
      %p117 = scmp.ne.s32.totalorder %s106, %s109
      %p118 = scmp.eq.s32.totalorder %s17, 1
      %p119 = por %p117, %p118
      %p120 = scmp.ne.s32.totalorder %s109, %s110
      %p121 = scmp.eq.s32.totalorder %s17, 0
      %p122 = por %p120, %p121
      %p123 = scmp.ne.s32.totalorder %s109, %s110
      %p124 = scmp.eq.s32.totalorder %s18, 1
      %p125 = por %p123, %p124
      %p127 = scmp.ne.s32.totalorder %s110, %s126
      %p128 = scmp.eq.s32.totalorder %s18, 0
      %p129 = por %p127, %p128
      %p130 = scmp.le.s32.totalorder 1, %s12
      %p131 = scmp.lt.s32.totalorder %s12, 3
      %p132 = pnand %p130, %p131
      %p133 = pneg %p132
      // Predicated region
      $region9: #{tpu_custom_call.1} parent=5 // pred_check
        _
      $region10: #{tpu_custom_call.1} parent=5 // pred_check_branch
        %135 = sbr.rel (%p132) target = $region12
      $region11: #{tpu_custom_call.1} parent=5 // pred_region
        %s136 = ssub.s32 %s12, 1
        // Predicated region
        $region13: #{tpu_custom_call.1} parent=11 // pred_check
          %p137 = pneg %p73
        $region14: #{tpu_custom_call.1} parent=11 // pred_check_branch
          %139 = sbr.rel (%p137) target = $region16
        $region15: #{tpu_custom_call.1} parent=11 // pred_region
          _
        $region16: #{tpu_custom_call.1} parent=11 // pred_fallthru
          _
        // Predicated region
        $region17: #{tpu_custom_call.1} parent=11 // pred_check
          %p140 = pneg %p94
        $region18: #{tpu_custom_call.1} parent=11 // pred_check_branch
          %142 = sbr.rel (%p140) target = $region20
        $region19: #{tpu_custom_call.1} parent=11 // pred_region
          _
        $region20: #{tpu_custom_call.1} parent=11 // pred_fallthru
          _
      $region12: #{tpu_custom_call.1} parent=5 // pred_fallthru
        _
      %p143 = scmp.lt.s32.totalorder %s12, 2
      // Predicated region
      $region21: #{tpu_custom_call.1} parent=5 // pred_check
        %p144 = pneg %p143
      $region22: #{tpu_custom_call.1} parent=5 // pred_check_branch
        %146 = sbr.rel (%p144) target = $region24
      $region23: #{tpu_custom_call.1} parent=5 // pred_region
        // Predicated region
        $region25: #{tpu_custom_call.1} parent=23 // pred_check
          %p147 = pneg %p46
        $region26: #{tpu_custom_call.1} parent=23 // pred_check_branch
          %149 = sbr.rel (%p147) target = $region28
        $region27: #{tpu_custom_call.1} parent=23 // pred_region
          %s150 = smul.u32 3, %s20
          %p151 = scmp.lt.s32.totalorder %s19, 1
          %s152 = scalar_select %p151, %s19, 1
          %p153 = scmp.lt.s32.totalorder %s150, 2
          %s154 = scalar_select %p153, %s150, 2
          %s155 = smul.addr %s152, 3
          %s156 = sadd.s32 %s154, %s155
          %s157 = smul.addr %s156, 4
          %s158 = scalar_lea.vmem %s0, %s157
          %s159 = smul.u32 3, %s20
        $region28: #{tpu_custom_call.1} parent=23 // pred_fallthru
          _
      $region24: #{tpu_custom_call.1} parent=5 // pred_fallthru
        _
      %p160 = scmp.le.s32.totalorder 1, %s12
      %p161 = scmp.lt.s32.totalorder %s12, 3
      %p162 = pnand %p160, %p161
      %p163 = pneg %p162
      // Predicated region
      $region29: #{tpu_custom_call.1} parent=5 // pred_check
        _
      $region30: #{tpu_custom_call.1} parent=5 // pred_check_branch
        %165 = sbr.rel (%p162) target = $region32
      $region31: #{tpu_custom_call.1} parent=5 // pred_region
        %s166 = ssub.s32 %s12, 1
        %s167 = smul.u32 3, %s22
        %p168 = scmp.lt.s32.totalorder %s21, 1
        %s169 = scalar_select %p168, %s21, 1
        %p170 = scmp.lt.s32.totalorder %s167, 2
        %s171 = scalar_select %p170, %s167, 2
        %s172 = smul.addr %s169, 3
        %s173 = sadd.s32 %s171, %s172
        %s174 = smul.addr %s173, 4
        %s175 = scalar_lea.vmem %s0, %s174
        %p176 = pneg %p52
        %p177 = pneg %p49
        %p178 = pneg %p73
        %p179 = pneg %p70
        %p180 = pneg %p94
        %p181 = pneg %p91
        %p182 = pneg %p122
        %p183 = pneg %p119
        %s184 = sand.u32 %s109, 1
        %s185 = scalar_lea.sflag [#allocation3], %s184
        %s186 = sand.u32 %s109, 1
        %s187 = smul.addr %s186, 24
        %s188 = scalar_lea.vmem [#allocation2], %s187
        %s189 = smul.u32 3, %s22
        %p190 = scmp.lt.s32.totalorder %s21, 1
        %s191 = scalar_select %p190, %s21, 1
        %p192 = scmp.lt.s32.totalorder %s189, 2
        %s193 = scalar_select %p192, %s189, 2
        %s194 = smul.addr %s191, 3
        %s195 = sadd.s32 %s193, %s194
        %s196 = smul.addr %s195, 4
        %s197 = scalar_lea.vmem %s0, %s196
        %s198 = smul.u32 3, %s22
        %s199 = smul.u32 3, %s22
        %v200 = vld [vmem:[%s1] sm:$0xff]
        %v201 = vld [vmem:[%s197] ss:$4 sm:$0x7]
        %203 = vset.pattern.permute.xlu0 0
        %204 = vperm.xlu0 %203, %v200
        %v205 = vpop.permute.xlu0 %204
        %v208 = vperm.slane %v201, 0
        %v209 = vperm.slane %v201, 1
        %v210 = vperm.slane %v201, 2
        %v214 = vmul.f32 %v205, %v208
        %v215 = vmul.f32 %v205, %v209
        %v216 = vmul.f32 %v205, %v210
        %v217 = vld [vmem:[%s2] sm:$0xff]
        %219 = vset.pattern.permute.xlu0 0
        %220 = vperm.xlu0 %219, %v217
        %v221 = vpop.permute.xlu0 %220
        %v223 = vadd.f32 %v214, %v221
        %v224 = vadd.f32 %v215, %v221
        %v225 = vadd.f32 %v216, %v221
        %s226 = scalar_lea.vmem %s197, 1
        %v227 = vld [vmem:[%s226] ss:$4 sm:$0x7]
        %228 = vset.pattern.permute.xlu0 1
        %229 = vperm.xlu0 %228, %v200
        %v230 = vpop.permute.xlu0 %229
        %v233 = vperm.slane %v227, 0
        %v234 = vperm.slane %v227, 1
        %v235 = vperm.slane %v227, 2
        %v239 = vmul.f32 %v230, %v233
        %v240 = vmul.f32 %v230, %v234
        %v241 = vmul.f32 %v230, %v235
        %v242 = vadd.f32 %v223, %v239
        %v243 = vadd.f32 %v224, %v240
        %v244 = vadd.f32 %v225, %v241
        %s245 = scalar_lea.vmem %s197, 2
        %v246 = vld [vmem:[%s245] ss:$4 sm:$0x7]
        %247 = vset.pattern.permute.xlu0 2
        %248 = vperm.xlu0 %247, %v200
        %v249 = vpop.permute.xlu0 %248
        %v252 = vperm.slane %v246, 0
        %v253 = vperm.slane %v246, 1
        %v254 = vperm.slane %v246, 2
        %v258 = vmul.f32 %v249, %v252
        %v259 = vmul.f32 %v249, %v253
        %v260 = vmul.f32 %v249, %v254
        %v261 = vadd.f32 %v242, %v258
        %v262 = vadd.f32 %v243, %v259
        %v263 = vadd.f32 %v244, %v260
        %v264 = vtanh.pop %v261
        %v265 = vtanh.pop %v262
        %v266 = vtanh.pop %v263
        %267 = vst [vmem:[%s188] sm:$0xff] %v264
        %268 = vst [vmem:[%s188 + $0x8] sm:$0xff] %v265
        %vm269 = vcmask 556032
        %270 = vst.msk [vmem:[%s188 + $0x10] sm:$0xff] %vm269, %v266
        %s271 = sand.u32 %s109, 1
        %s272 = scalar_lea.sflag [#allocation3], %s271
        %s273 = sand.u32 %s109, 1
        %s274 = smul.addr %s273, 24
        %s275 = scalar_lea.vmem [#allocation2], %s274
        // Predicated region
        $region33: #{tpu_custom_call.1} parent=31 // pred_check
          %p276 = pneg %p119
        $region34: #{tpu_custom_call.1} parent=31 // pred_check_branch
          %278 = sbr.rel (%p276) target = $region36
        $region35: #{tpu_custom_call.1} parent=31 // pred_region
          %s279 = smul.u32 3, %s22
          %281 = vsyncadd %s272, 0
          %s282 = smul.addr %s21, 3
          %s283 = sadd.s32 %s279, %s282
          %s284 = smul.addr %s283, 8
          %s285 = scalar_lea.hbm %s3, %s284
          %s287 = sshll.u32 %s275, 4
          %s288 = int_to_ptr.vmem [resolvable:$true] %s287
          %s289 = sshll.u32 %s285, 4
          %s290 = int_to_ptr.hbm [resolvable:$true] %s289
          %292 = dma.vmem_to_hbm [thread:$0]  %s288, 384, %s290, %s272
        $region36: #{tpu_custom_call.1} parent=31 // pred_fallthru
          _
      $region32: #{tpu_custom_call.1} parent=5 // pred_fallthru
        _
      %p293 = scmp.le.s32.totalorder 2, %s12
      // Predicated region
      $region37: #{tpu_custom_call.1} parent=5 // pred_check
        %p294 = pneg %p293
      $region38: #{tpu_custom_call.1} parent=5 // pred_check_branch
        %296 = sbr.rel (%p294) target = $region40
      $region39: #{tpu_custom_call.1} parent=5 // pred_region
        %s297 = ssub.s32 %s12, 2
        // Predicated region
        $region41: #{tpu_custom_call.1} parent=39 // pred_check
          %p298 = pneg %p125
        $region42: #{tpu_custom_call.1} parent=39 // pred_check_branch
          %300 = sbr.rel (%p298) target = $region44
        $region43: #{tpu_custom_call.1} parent=39 // pred_region
          %s301 = sand.u32 %s110, 1
          %s302 = scalar_lea.sflag [#allocation3], %s301
          %s303 = sand.u32 %s110, 1
          %s304 = smul.addr %s303, 24
          %s305 = scalar_lea.vmem [#allocation2], %s304
          %307 = dma.done %s302, 384
        $region44: #{tpu_custom_call.1} parent=39 // pred_fallthru
          _
      $region40: #{tpu_custom_call.1} parent=5 // pred_fallthru
        _
    $region6: #{tpu_custom_call.1} parent=1 // loop_footer
      %s16 = sadd.s32 1, %s12
    $region7: #{tpu_custom_call.1} parent=1 // loop_footer_branch
      %11 = sbr.rel target = $region3
    $region8: #{tpu_custom_call.1} parent=1 // loop_exit
      _
    %308 = vsyncpa [#allocation3], 1
    %s309 = scalar_lea.sflag [#allocation3], 1
    %310 = vsyncpa %s309, 1

</llo_original>
